<compile_context>
chip_gen: v5e
topology: v5e:2x2
jax: 0.10.0
libtpu: 0.0.40
codegen_flags: <defaults>
</compile_context>

<pallas_src>
import jax
import jax.numpy as jnp
from jax.experimental import pallas as pl
from jax.experimental.pallas import tpu as pltpu


def conv_block_kernel(x_ref, wb1_ref, s1_ref, wb2_ref, s2_ref, o_ref, pad1, pad2):
    """One batch element per grid step; both conv+BN+ReLU layers fused, lane-dense.

    x_ref   : (1, H, W*Cin)        f32 lane-dense input slab
    wb1_ref : (3, (W+2)*Cin, W*C1) bf16 banded layer-1 weights (BN scale folded in)
    s1_ref  : (1, W*C1)            f32 folded per-channel shift, tiled over W
    wb2_ref : (3, (W+2)*C1, W*C2)  bf16 banded layer-2 weights
    s2_ref  : (1, W*C2)            f32
    o_ref   : (1, H, W*C2)         f32 lane-dense output slab
    pad1    : (H+2, (W+2)*Cin)     f32 VMEM scratch = zero-padded layer-1 input
    pad2    : (H+2, (W+2)*C1)      f32 VMEM scratch = zero-padded layer-2 input
    """
    H = x_ref.shape[1]
    WCin = x_ref.shape[2]
    Cin = (pad1.shape[1] - WCin) // 2          # halo lane offset, layer 1
    WC1 = s1_ref.shape[1]
    C1 = (pad2.shape[1] - WC1) // 2            # halo lane offset, layer 2

    # Zero the padded scratches (border stays zero after the interior stores below).
    # NOT gated on program_id==0: with a "parallel" batch axis the second TensorCore
    # would never execute step 0 and would read garbage halos.
    pad1[...] = jnp.zeros_like(pad1)
    pad2[...] = jnp.zeros_like(pad2)

    # ---- Layer 1: one interior store gives "same" padding for free, then 3 banded
    #      MXU matmuls (one per kernel row kh).  Everything stays lane-dense.
    pad1[pl.ds(1, H), pl.ds(Cin, WCin)] = x_ref[0]

    acc1 = jnp.dot(pad1[pl.ds(0, H), :].astype(jnp.bfloat16), wb1_ref[0],
                   preferred_element_type=jnp.float32)
    for kh in (1, 2):
        acc1 = acc1 + jnp.dot(pad1[pl.ds(kh, H), :].astype(jnp.bfloat16), wb1_ref[kh],
                              preferred_element_type=jnp.float32)
    a1 = jnp.maximum(acc1 + s1_ref[...], 0.0)                     # (H, W*C1) f32

    # ---- Layer 2: write the post-ReLU activation straight into the interior of the
    #      pre-zeroed layer-2 scratch (free halo padding, no relayout, no HBM trip).
    pad2[pl.ds(1, H), pl.ds(C1, WC1)] = a1

    acc2 = jnp.dot(pad2[pl.ds(0, H), :].astype(jnp.bfloat16), wb2_ref[0],
                   preferred_element_type=jnp.float32)
    for kh in (1, 2):
        acc2 = acc2 + jnp.dot(pad2[pl.ds(kh, H), :].astype(jnp.bfloat16), wb2_ref[kh],
                              preferred_element_type=jnp.float32)

    # Single unmasked lane-dense store (last dim W*C2 = 128 for the test shape).
    o_ref[0, ...] = jnp.maximum(acc2 + s2_ref[...], 0.0).astype(o_ref.dtype)


def _fold_and_band(params, W, eps=1e-5):
    """Fold conv bias + inference BN into the conv weights, then turn the 3x3 kernel into
    3 block-Toeplitz ("banded") matrices so the conv becomes 3 lane-dense MXU matmuls.

    Returns:
      wb    : (3, (W+2)*Cin, W*Cout) bf16, wb[kh][(w+kw)*Cin+cin, w*Cout+cout] =
              (w_conv * bn_scale)[kh, kw, cin, cout]
      shift : (1, W*Cout) f32 = ((bias - mean) * bn_scale + beta) tiled over W
    """
    w, bias, gamma, beta, mean, var = params              # w: HWIO (3, 3, Cin, Cout)
    Cin, Cout = w.shape[2], w.shape[3]
    scale = gamma / jnp.sqrt(var + eps)                   # (Cout,)
    w_f = (w * scale).astype(jnp.float32)                 # BN scale folded into weights

    eye = jnp.eye(W + 2, dtype=jnp.float32)
    banded = []
    for kh in range(3):
        acc = jnp.zeros(((W + 2) * Cin, W * Cout), jnp.float32)
        for kw in range(3):
            sel = eye[:, kw:kw + W]                       # (W+2, W), sel[w+kw, w] = 1
            acc = acc + jnp.kron(sel, w_f[kh, kw])        # block-Toeplitz band
        banded.append(acc)
    wb = jnp.stack(banded).astype(jnp.bfloat16)           # (3, (W+2)*Cin, W*Cout)

    shift = (bias - mean) * scale + beta                  # (Cout,)
    shift = jnp.tile(shift, W).reshape(1, W * Cout).astype(jnp.float32)
    return wb, shift


def conv_block_forward(x_nchw, params1, params2, eps=1e-5):
    """PyTorch-layout (NCHW) entry point for the fused conv_block (inference-mode BN)."""
    N, Cin, H, W = x_nchw.shape
    C1 = params1[0].shape[3]
    C2 = params2[0].shape[3]

    # NCHW -> NHWC -> lane-dense (N, H, W*Cin).
    # TODO(synk): production callers should pass NHWC / lane-dense slabs directly; these
    # two transposes are full HBM passes that only exist to match the PyTorch interface.
    x = jnp.transpose(x_nchw, (0, 2, 3, 1)).reshape(N, H, W * Cin)

    wb1, s1 = _fold_and_band(params1, W, eps)
    wb2, s2 = _fold_and_band(params2, W, eps)

    out = pl.pallas_call(
        conv_block_kernel,
        out_shape=jax.ShapeDtypeStruct((N, H, W * C2), jnp.float32),
        grid=(N,),
        in_specs=[
            pl.BlockSpec((1, H, W * Cin), lambda b: (b, 0, 0)),
            # TODO(synk): mark the 4 constant operands pipeline_mode=pl.Buffered(1) once
            # single-buffered pipeline_mode is confirmed on the deployed jax version.
            pl.BlockSpec(wb1.shape, lambda b: (0, 0, 0)),
            pl.BlockSpec(s1.shape, lambda b: (0, 0)),
            pl.BlockSpec(wb2.shape, lambda b: (0, 0, 0)),
            pl.BlockSpec(s2.shape, lambda b: (0, 0)),
        ],
        out_specs=pl.BlockSpec((1, H, W * C2), lambda b: (b, 0, 0)),
        scratch_shapes=[
            pltpu.VMEM((H + 2, (W + 2) * Cin), jnp.float32),   # padded layer-1 input
            pltpu.VMEM((H + 2, (W + 2) * C1), jnp.float32),    # padded layer-2 input
        ],
        # Batch axis is independent -> megacore parts (v7x) can shard it across TCs.
        # TODO(synk): on single-TC v5e/v6e fold the batch into the matmul M dimension
        # (grid=(1,)) and set vmem_limit_bytes when production row-tiling lands.
        compiler_params=pltpu.CompilerParams(dimension_semantics=("parallel",)),
    )(x, wb1, s1, wb2, s2)

    # (N, H, W*C2) -> NHWC -> NCHW (PyTorch layout).
    return jnp.transpose(out.reshape(N, H, W, C2), (0, 3, 1, 2))


def init_layer_params(key, in_ch, out_ch):
    k_w, k_b, k_g, k_be, k_m, k_v = jax.random.split(key, 6)
    w = jax.random.normal(k_w, (3, 3, in_ch, out_ch), jnp.float32) * 0.1   # HWIO
    bias = jax.random.normal(k_b, (out_ch,), jnp.float32) * 0.05
    gamma = 1.0 + 0.1 * jax.random.normal(k_g, (out_ch,), jnp.float32)
    beta = 0.05 * jax.random.normal(k_be, (out_ch,), jnp.float32)
    running_mean = 0.1 * jax.random.normal(k_m, (out_ch,), jnp.float32)
    running_var = 1.0 + 0.1 * jnp.abs(jax.random.normal(k_v, (out_ch,), jnp.float32))
    return (w, bias, gamma, beta, running_mean, running_var)


def _reference_forward(x_nchw, params1, params2, eps=1e-5):
    """Pure-JAX f32 reference (lax conv) for correctness checking."""
    def layer(x_nhwc, p):
        w, bias, gamma, beta, mean, var = p
        y = jax.lax.conv_general_dilated(
            x_nhwc, w, window_strides=(1, 1), padding=((1, 1), (1, 1)),
            dimension_numbers=("NHWC", "HWIO", "NHWC"))
        y = y + bias
        y = (y - mean) / jnp.sqrt(var + eps) * gamma + beta
        return jnp.maximum(y, 0.0)

    x = jnp.transpose(x_nchw, (0, 2, 3, 1))
    x = layer(x, params1)
    x = layer(x, params2)
    return jnp.transpose(x, (0, 3, 1, 2))


if __name__ == "__main__":
    key = jax.random.PRNGKey(0)
    k_x, k_p1, k_p2 = jax.random.split(key, 3)

    N, in_ch, out_ch, S = 2, 4, 8, 16
    x = jax.random.normal(k_x, (N, in_ch, S, S), jnp.float32)  # NCHW like PyTorch

    params1 = init_layer_params(k_p1, in_ch, out_ch)
    params2 = init_layer_params(k_p2, out_ch, out_ch)

    out = conv_block_forward(x, params1, params2)
    out = jax.block_until_ready(out)

    ref = jax.block_until_ready(_reference_forward(x, params1, params2))
    assert out.shape == (N, out_ch, S, S)
    # Tolerance loosened vs the all-f32 version because MXU operands are bf16 now.
    assert jnp.allclose(out, ref, atol=5e-2, rtol=5e-2), "mismatch vs reference"

    print("KERNEL_OK")
</pallas_src>

<mosaic_0001>
module attributes {stable_mosaic.version = 11 : i64} {
  func.func @conv_block_kernel(%arg0: i32, %arg1: memref<1x16x64xf32, #tpu.memory_space<vmem>>, %arg2: memref<3x72x128xbf16, #tpu.memory_space<vmem>>, %arg3: memref<1x128xf32, #tpu.memory_space<vmem>>, %arg4: memref<3x144x128xbf16, #tpu.memory_space<vmem>>, %arg5: memref<1x128xf32, #tpu.memory_space<vmem>>, %arg6: memref<1x16x128xf32, #tpu.memory_space<vmem>>, %arg7: memref<18x72xf32, #tpu.memory_space<vmem>>, %arg8: memref<18x144xf32, #tpu.memory_space<vmem>>) attributes {dimension_semantics = [#tpu.dimension_semantics<parallel>], iteration_bounds = array<i64: 2>, scalar_prefetch = 0 : i64, scratch_operands = 2 : i64, tpu.core_type = #tpu.core_type<tc>, window_params = [{transform_indices = @transform_0, window_bounds = array<i64: 1, 16, 64>}, {pipeline_mode = #tpu.pipeline_mode<synchronous>, transform_indices = @transform_1, window_bounds = array<i64: 3, 72, 128>}, {pipeline_mode = #tpu.pipeline_mode<synchronous>, transform_indices = @transform_2, window_bounds = array<i64: 1, 128>}, {pipeline_mode = #tpu.pipeline_mode<synchronous>, transform_indices = @transform_3, window_bounds = array<i64: 3, 144, 128>}, {pipeline_mode = #tpu.pipeline_mode<synchronous>, transform_indices = @transform_4, window_bounds = array<i64: 1, 128>}, {transform_indices = @transform_5, window_bounds = array<i64: 1, 16, 128>}]} {
    %cst = arith.constant 0.000000e+00 : f32
    %0 = vector.broadcast %cst : f32 to vector<18x72xf32>
    %c0 = arith.constant 0 : index
    %c0_0 = arith.constant 0 : index
    %1 = vector.load %arg7[%c0, %c0_0] : memref<18x72xf32, #tpu.memory_space<vmem>>, vector<18x72xf32>
    tpu.vector_store %arg7[%c0, %c0_0], %0 {strides = array<i32>} : memref<18x72xf32, #tpu.memory_space<vmem>>, vector<18x72xf32>,
    %cst_1 = arith.constant 0.000000e+00 : f32
    %2 = vector.broadcast %cst_1 : f32 to vector<18x144xf32>
    %c0_2 = arith.constant 0 : index
    %c0_3 = arith.constant 0 : index
    %3 = vector.load %arg8[%c0_2, %c0_3] : memref<18x144xf32, #tpu.memory_space<vmem>>, vector<18x144xf32>
    tpu.vector_store %arg8[%c0_2, %c0_3], %2 {strides = array<i32>} : memref<18x144xf32, #tpu.memory_space<vmem>>, vector<18x144xf32>,
    %c0_4 = arith.constant 0 : index
    %c0_5 = arith.constant 0 : index
    %c0_6 = arith.constant 0 : index
    %4 = vector.load %arg1[%c0_4, %c0_5, %c0_6] : memref<1x16x64xf32, #tpu.memory_space<vmem>>, vector<1x16x64xf32>
    %5 = vector.shape_cast %4 : vector<1x16x64xf32> to vector<16x64xf32>
    %c1 = arith.constant 1 : index
    %c4 = arith.constant 4 : index
    %6 = vector.load %arg7[%c1, %c4] : memref<18x72xf32, #tpu.memory_space<vmem>>, vector<16x64xf32>
    tpu.vector_store %arg7[%c1, %c4], %5 {strides = array<i32>} : memref<18x72xf32, #tpu.memory_space<vmem>>, vector<16x64xf32>,
    %c0_7 = arith.constant 0 : index
    %c0_8 = arith.constant 0 : index
    %7 = vector.load %arg7[%c0_7, %c0_8] : memref<18x72xf32, #tpu.memory_space<vmem>>, vector<16x72xf32>
    %8 = arith.truncf %7 : vector<16x72xf32> to vector<16x72xbf16>
    %c0_9 = arith.constant 0 : index
    %c0_10 = arith.constant 0 : index
    %c0_11 = arith.constant 0 : index
    %9 = vector.load %arg2[%c0_9, %c0_10, %c0_11] : memref<3x72x128xbf16, #tpu.memory_space<vmem>>, vector<1x72x128xbf16>
    %10 = vector.shape_cast %9 : vector<1x72x128xbf16> to vector<72x128xbf16>
    %cst_12 = arith.constant dense<0.000000e+00> : vector<16x128xf32>
    %11 = tpu.matmul %8, %10, %cst_12 {dimension_numbers = #tpu.dot_dimension_numbers<[1], [0], [0], [1], [0, 0, 1, 1], [], []>} : vector<16x72xbf16>, vector<72x128xbf16>, vector<16x128xf32> -> vector<16x128xf32>
    %c1_13 = arith.constant 1 : index
    %c0_14 = arith.constant 0 : index
    %12 = vector.load %arg7[%c1_13, %c0_14] : memref<18x72xf32, #tpu.memory_space<vmem>>, vector<16x72xf32>
    %13 = arith.truncf %12 : vector<16x72xf32> to vector<16x72xbf16>
    %c1_15 = arith.constant 1 : index
    %c0_16 = arith.constant 0 : index
    %c0_17 = arith.constant 0 : index
    %14 = vector.load %arg2[%c1_15, %c0_16, %c0_17] : memref<3x72x128xbf16, #tpu.memory_space<vmem>>, vector<1x72x128xbf16>
    %15 = vector.shape_cast %14 : vector<1x72x128xbf16> to vector<72x128xbf16>
    %cst_18 = arith.constant dense<0.000000e+00> : vector<16x128xf32>
    %16 = tpu.matmul %13, %15, %cst_18 {dimension_numbers = #tpu.dot_dimension_numbers<[1], [0], [0], [1], [0, 0, 1, 1], [], []>} : vector<16x72xbf16>, vector<72x128xbf16>, vector<16x128xf32> -> vector<16x128xf32>
    %17 = arith.addf %11, %16 : vector<16x128xf32>
    %c2 = arith.constant 2 : index
    %c0_19 = arith.constant 0 : index
    %18 = vector.load %arg7[%c2, %c0_19] : memref<18x72xf32, #tpu.memory_space<vmem>>, vector<16x72xf32>
    %19 = arith.truncf %18 : vector<16x72xf32> to vector<16x72xbf16>
    %c2_20 = arith.constant 2 : index
    %c0_21 = arith.constant 0 : index
    %c0_22 = arith.constant 0 : index
    %20 = vector.load %arg2[%c2_20, %c0_21, %c0_22] : memref<3x72x128xbf16, #tpu.memory_space<vmem>>, vector<1x72x128xbf16>
    %21 = vector.shape_cast %20 : vector<1x72x128xbf16> to vector<72x128xbf16>
    %cst_23 = arith.constant dense<0.000000e+00> : vector<16x128xf32>
    %22 = tpu.matmul %19, %21, %cst_23 {dimension_numbers = #tpu.dot_dimension_numbers<[1], [0], [0], [1], [0, 0, 1, 1], [], []>} : vector<16x72xbf16>, vector<72x128xbf16>, vector<16x128xf32> -> vector<16x128xf32>
    %23 = arith.addf %17, %22 : vector<16x128xf32>
    %c0_24 = arith.constant 0 : index
    %c0_25 = arith.constant 0 : index
    %24 = vector.load %arg3[%c0_24, %c0_25] : memref<1x128xf32, #tpu.memory_space<vmem>>, vector<1x128xf32>
    %25 = vector.broadcast %24 : vector<1x128xf32> to vector<16x128xf32>
    %26 = arith.addf %23, %25 : vector<16x128xf32>
    %cst_26 = arith.constant 0.000000e+00 : f32
    %27 = vector.broadcast %cst_26 : f32 to vector<16x128xf32>
    %28 = arith.maximumf %26, %27 : vector<16x128xf32>
    %c1_27 = arith.constant 1 : index
    %c8 = arith.constant 8 : index
    %29 = vector.load %arg8[%c1_27, %c8] : memref<18x144xf32, #tpu.memory_space<vmem>>, vector<16x128xf32>
    tpu.vector_store %arg8[%c1_27, %c8], %28 {strides = array<i32>} : memref<18x144xf32, #tpu.memory_space<vmem>>, vector<16x128xf32>,
    %c0_28 = arith.constant 0 : index
    %c0_29 = arith.constant 0 : index
    %30 = vector.load %arg8[%c0_28, %c0_29] : memref<18x144xf32, #tpu.memory_space<vmem>>, vector<16x144xf32>
    %31 = arith.truncf %30 : vector<16x144xf32> to vector<16x144xbf16>
    %c0_30 = arith.constant 0 : index
    %c0_31 = arith.constant 0 : index
    %c0_32 = arith.constant 0 : index
    %32 = vector.load %arg4[%c0_30, %c0_31, %c0_32] : memref<3x144x128xbf16, #tpu.memory_space<vmem>>, vector<1x144x128xbf16>
    %33 = vector.shape_cast %32 : vector<1x144x128xbf16> to vector<144x128xbf16>
    %cst_33 = arith.constant dense<0.000000e+00> : vector<16x128xf32>
    %34 = tpu.matmul %31, %33, %cst_33 {dimension_numbers = #tpu.dot_dimension_numbers<[1], [0], [0], [1], [0, 0, 1, 1], [], []>} : vector<16x144xbf16>, vector<144x128xbf16>, vector<16x128xf32> -> vector<16x128xf32>
    %c1_34 = arith.constant 1 : index
    %c0_35 = arith.constant 0 : index
    %35 = vector.load %arg8[%c1_34, %c0_35] : memref<18x144xf32, #tpu.memory_space<vmem>>, vector<16x144xf32>
    %36 = arith.truncf %35 : vector<16x144xf32> to vector<16x144xbf16>
    %c1_36 = arith.constant 1 : index
    %c0_37 = arith.constant 0 : index
    %c0_38 = arith.constant 0 : index
    %37 = vector.load %arg4[%c1_36, %c0_37, %c0_38] : memref<3x144x128xbf16, #tpu.memory_space<vmem>>, vector<1x144x128xbf16>
    %38 = vector.shape_cast %37 : vector<1x144x128xbf16> to vector<144x128xbf16>
    %cst_39 = arith.constant dense<0.000000e+00> : vector<16x128xf32>
    %39 = tpu.matmul %36, %38, %cst_39 {dimension_numbers = #tpu.dot_dimension_numbers<[1], [0], [0], [1], [0, 0, 1, 1], [], []>} : vector<16x144xbf16>, vector<144x128xbf16>, vector<16x128xf32> -> vector<16x128xf32>
    %40 = arith.addf %34, %39 : vector<16x128xf32>
    %c2_40 = arith.constant 2 : index
    %c0_41 = arith.constant 0 : index
    %41 = vector.load %arg8[%c2_40, %c0_41] : memref<18x144xf32, #tpu.memory_space<vmem>>, vector<16x144xf32>
    %42 = arith.truncf %41 : vector<16x144xf32> to vector<16x144xbf16>
    %c2_42 = arith.constant 2 : index
    %c0_43 = arith.constant 0 : index
    %c0_44 = arith.constant 0 : index
    %43 = vector.load %arg4[%c2_42, %c0_43, %c0_44] : memref<3x144x128xbf16, #tpu.memory_space<vmem>>, vector<1x144x128xbf16>
    %44 = vector.shape_cast %43 : vector<1x144x128xbf16> to vector<144x128xbf16>
    %cst_45 = arith.constant dense<0.000000e+00> : vector<16x128xf32>
    %45 = tpu.matmul %42, %44, %cst_45 {dimension_numbers = #tpu.dot_dimension_numbers<[1], [0], [0], [1], [0, 0, 1, 1], [], []>} : vector<16x144xbf16>, vector<144x128xbf16>, vector<16x128xf32> -> vector<16x128xf32>
    %46 = arith.addf %40, %45 : vector<16x128xf32>
    %c0_46 = arith.constant 0 : index
    %c0_47 = arith.constant 0 : index
    %47 = vector.load %arg5[%c0_46, %c0_47] : memref<1x128xf32, #tpu.memory_space<vmem>>, vector<1x128xf32>
    %48 = vector.broadcast %47 : vector<1x128xf32> to vector<16x128xf32>
    %49 = arith.addf %46, %48 : vector<16x128xf32>
    %cst_48 = arith.constant 0.000000e+00 : f32
    %50 = vector.broadcast %cst_48 : f32 to vector<16x128xf32>
    %51 = arith.maximumf %49, %50 : vector<16x128xf32>
    %c0_49 = arith.constant 0 : index
    %c0_50 = arith.constant 0 : index
    %c0_51 = arith.constant 0 : index
    %52 = vector.load %arg6[%c0_49, %c0_50, %c0_51] : memref<1x16x128xf32, #tpu.memory_space<vmem>>, vector<1x16x128xf32>
    %53 = vector.shape_cast %52 : vector<1x16x128xf32> to vector<16x128xf32>
    %54 = vector.shape_cast %51 : vector<16x128xf32> to vector<1x16x128xf32>
    tpu.vector_store %arg6[%c0_49, %c0_50, %c0_51], %54 {strides = array<i32>} : memref<1x16x128xf32, #tpu.memory_space<vmem>>, vector<1x16x128xf32>,
    return
  }
  func.func @transform_0(%arg0: i32) -> (i32, i32, i32) {
    %c0_i32 = arith.constant 0 : i32
    %c0_i32_0 = arith.constant 0 : i32
    %c0_i32_1 = arith.constant 0 : i32
    return %arg0, %c0_i32, %c0_i32_0 : i32, i32, i32
  }
  func.func @transform_1(%arg0: i32) -> (i32, i32, i32) {
    %c0_i32 = arith.constant 0 : i32
    %c0_i32_0 = arith.constant 0 : i32
    %c0_i32_1 = arith.constant 0 : i32
    %c0_i32_2 = arith.constant 0 : i32
    return %c0_i32, %c0_i32_0, %c0_i32_1 : i32, i32, i32
  }
  func.func @transform_2(%arg0: i32) -> (i32, i32) {
    %c0_i32 = arith.constant 0 : i32
    %c0_i32_0 = arith.constant 0 : i32
    %c0_i32_1 = arith.constant 0 : i32
    return %c0_i32, %c0_i32_0 : i32, i32
  }
  func.func @transform_3(%arg0: i32) -> (i32, i32, i32) {
    %c0_i32 = arith.constant 0 : i32
    %c0_i32_0 = arith.constant 0 : i32
    %c0_i32_1 = arith.constant 0 : i32
    %c0_i32_2 = arith.constant 0 : i32
    return %c0_i32, %c0_i32_0, %c0_i32_1 : i32, i32, i32
  }
  func.func @transform_4(%arg0: i32) -> (i32, i32) {
    %c0_i32 = arith.constant 0 : i32
    %c0_i32_0 = arith.constant 0 : i32
    %c0_i32_1 = arith.constant 0 : i32
    return %c0_i32, %c0_i32_0 : i32, i32
  }
  func.func @transform_5(%arg0: i32) -> (i32, i32, i32) {
    %c0_i32 = arith.constant 0 : i32
    %c0_i32_0 = arith.constant 0 : i32
    %c0_i32_1 = arith.constant 0 : i32
    return %arg0, %c0_i32, %c0_i32_0 : i32, i32, i32
  }
}

</mosaic_0001>

<llo_original>
// kernel: tpu_custom_call.1
$region0: #{tpu_custom_call.1}
  #allocation0 [shape = 'u32[]', space=smem, size = 0x4, offset = 0x4, fixed_abs, tag = 'smem constant byte address 0x4 - core index']
  #allocation1 [shape = 'u32[72,128]{1,0:T(1,128)}', space=vmem, size = 0x9000, scoped, tag = 'internal scratch']
  #allocation2 [shape = 'f32[18,72]{1,0:T(8,128)}', space=vmem, size = 0x3000, scoped, tag = 'scratch operand']
  #allocation3 [shape = 'f32[18,144]{1,0:T(8,128)}', space=vmem, size = 0x6000, scoped, tag = 'scratch operand']
  %s0 = inlined_call_operand.hbm [shape: f32[2,16,64], index: 0, kind: input, shape index: {}]
  %s1 = inlined_call_operand.hbm [shape: bf16[3,72,128], index: 1, kind: input, shape index: {}]
  %s2 = inlined_call_operand.vmem [shape: f32[1,128], index: 2, kind: input, shape index: {}]
  %s3 = inlined_call_operand.hbm [shape: bf16[3,144,128], index: 3, kind: input, shape index: {}]
  %s4 = inlined_call_operand.vmem [shape: f32[1,128], index: 4, kind: input, shape index: {}]
  %s5 = inlined_call_operand.hbm [shape: f32[2,16,128], index: 5, kind: output, shape index: {}]
  %s6 = sld [smem:[#allocation0]]
  $region65: #{tpu_custom_call.1} parent=0
    _
  %s8 = ssub.s32 1, %s6
  %s9 = scalar_select 0, %s8, %s6
  $region1: #{tpu_custom_call.1} parent=0
    #allocation4 [shape = 'u8[16384]{0}', space=vmem, size = 0x4000, scoped, tag = 'input window, operand 0']
    #allocation5 [shape = 's32[2]{0}', space=sflag, size = 0x8, scoped, tag = 'scoped memory for tpu_custom_call.1']
    #allocation6 [shape = 's32[2]{0}', space=sflag, size = 0x8, scoped, tag = 'scoped memory for tpu_custom_call.1']
    #allocation7 [shape = 'u8[55296]{0}', space=vmem, size = 0xd800, scoped, tag = 'input window, operand 1, single buffered']
    #allocation8 [shape = 's32[1]{0}', space=sflag, size = 0x4, scoped, tag = 'scoped memory for tpu_custom_call.1']
    #allocation9 [shape = 'u8[110592]{0}', space=vmem, size = 0x1b000, scoped, tag = 'input window, operand 3, single buffered']
    #allocation10 [shape = 'u8[16384]{0}', space=vmem, size = 0x4000, scoped, tag = 'output window, operand 0']
    %10 = vsyncpa [#allocation5], 0
    %s11 = scalar_lea.sflag [#allocation5], 1
    %12 = vsyncpa %s11, 0
    %13 = vsyncpa [#allocation8], 0
    %14 = vsyncpa [#allocation6], 0
    %s15 = scalar_lea.sflag [#allocation6], 1
    %16 = vsyncpa %s15, 0
    loop: start=0, step=1, limit=4
    $region2: #{tpu_custom_call.1} parent=1 // loop_pre_header
      _
    $region3: #{tpu_custom_call.1} parent=1 // loop_header
      %s18 = sphi 0, %s22
      %p19 = scmp.ge.s32.totalorder %s18, 4
      %s28 = sphi 0, %s30
      %s31 = sphi 0, %s28
      %s32 = sphi 0, %s31
      %s48 = sphi 0, %s32
      %s52 = sphi 0, %s52
      %s54 = sphi 0, %s52
      %s55 = sphi 0, %s54
      %s69 = sphi 0, %s55
      %s73 = sphi 0, %s73
      %s75 = sphi 0, %s73
      %s76 = sphi 0, %s75
      %s90 = sphi 0, %s76
      %s94 = sphi 0, %s94
      %s96 = sphi 0, %s94
      %s97 = sphi 0, %s96
      %s111 = sphi 0, %s97
      %s115 = sphi 0, %s115
      %s117 = sphi 0, %s115
      %s118 = sphi 0, %s117
      %s132 = sphi 0, %s118
      %s138 = sphi 0, %s140
      %s141 = sphi 0, %s138
      %s142 = sphi 0, %s141
      %s158 = sphi 0, %s142
    $region4: #{tpu_custom_call.1} parent=1 // loop_header_branch
      %21 = sbr.rel (%p19) target = $region8
    $region5: #{tpu_custom_call.1} parent=1 // loop_body
      %s23 = ssub.s32 %s18, 1
      %s24 = ssub.s32 %s18, 2
      %s25 = sadd.s32 %s18, 1
      %s26 = ssub.s32 %s18, %s25
      %p27 = scmp.eq.s32.totalorder %s26, 0
      %s29 = sadd.s32 %s28, 1
      %s30 = scalar_select %p27, %s28, %s29
      %p33 = pneg %p27
      %p34 = scmp.eq.s32.totalorder %s18, 1
      %p35 = por %p33, %p34
      %p36 = scmp.ne.s32.totalorder %s28, %s31
      %p37 = scmp.eq.s32.totalorder %s18, 0
      %p38 = por %p36, %p37
      %p39 = scmp.ne.s32.totalorder %s28, %s31
      %p40 = scmp.eq.s32.totalorder %s23, 1
      %p41 = por %p39, %p40
      %p42 = scmp.ne.s32.totalorder %s31, %s32
      %p43 = scmp.eq.s32.totalorder %s23, 0
      %p44 = por %p42, %p43
      %p45 = scmp.ne.s32.totalorder %s31, %s32
      %p46 = scmp.eq.s32.totalorder %s24, 1
      %p47 = por %p45, %p46
      %p49 = scmp.ne.s32.totalorder %s32, %s48
      %p50 = scmp.eq.s32.totalorder %s24, 0
      %p51 = por %p49, %p50
      %s53 = sadd.s32 %s52, 1
      %p56 = scmp.eq.s32.totalorder %s18, 1
      %p57 = scmp.ne.s32.totalorder %s52, %s54
      %p58 = scmp.eq.s32.totalorder %s18, 0
      %p59 = por %p57, %p58
      %p60 = scmp.ne.s32.totalorder %s52, %s54
      %p61 = scmp.eq.s32.totalorder %s23, 1
      %p62 = por %p60, %p61
      %p63 = scmp.ne.s32.totalorder %s54, %s55
      %p64 = scmp.eq.s32.totalorder %s23, 0
      %p65 = por %p63, %p64
      %p66 = scmp.ne.s32.totalorder %s54, %s55
      %p67 = scmp.eq.s32.totalorder %s24, 1
      %p68 = por %p66, %p67
      %p70 = scmp.ne.s32.totalorder %s55, %s69
      %p71 = scmp.eq.s32.totalorder %s24, 0
      %p72 = por %p70, %p71
      %s74 = sadd.s32 %s73, 1
      %p77 = scmp.eq.s32.totalorder %s18, 1
      %p78 = scmp.ne.s32.totalorder %s73, %s75
      %p79 = scmp.eq.s32.totalorder %s18, 0
      %p80 = por %p78, %p79
      %p81 = scmp.ne.s32.totalorder %s73, %s75
      %p82 = scmp.eq.s32.totalorder %s23, 1
      %p83 = por %p81, %p82
      %p84 = scmp.ne.s32.totalorder %s75, %s76
      %p85 = scmp.eq.s32.totalorder %s23, 0
      %p86 = por %p84, %p85
      %p87 = scmp.ne.s32.totalorder %s75, %s76
      %p88 = scmp.eq.s32.totalorder %s24, 1
      %p89 = por %p87, %p88
      %p91 = scmp.ne.s32.totalorder %s76, %s90
      %p92 = scmp.eq.s32.totalorder %s24, 0
      %p93 = por %p91, %p92
      %s95 = sadd.s32 %s94, 1
      %p98 = scmp.eq.s32.totalorder %s18, 1
      %p99 = scmp.ne.s32.totalorder %s94, %s96
      %p100 = scmp.eq.s32.totalorder %s18, 0
      %p101 = por %p99, %p100
      %p102 = scmp.ne.s32.totalorder %s94, %s96
      %p103 = scmp.eq.s32.totalorder %s23, 1
      %p104 = por %p102, %p103
      %p105 = scmp.ne.s32.totalorder %s96, %s97
      %p106 = scmp.eq.s32.totalorder %s23, 0
      %p107 = por %p105, %p106
      %p108 = scmp.ne.s32.totalorder %s96, %s97
      %p109 = scmp.eq.s32.totalorder %s24, 1
      %p110 = por %p108, %p109
      %p112 = scmp.ne.s32.totalorder %s97, %s111
      %p113 = scmp.eq.s32.totalorder %s24, 0
      %p114 = por %p112, %p113
      %s116 = sadd.s32 %s115, 1
      %p119 = scmp.eq.s32.totalorder %s18, 1
      %p120 = scmp.ne.s32.totalorder %s115, %s117
      %p121 = scmp.eq.s32.totalorder %s18, 0
      %p122 = por %p120, %p121
      %p123 = scmp.ne.s32.totalorder %s115, %s117
      %p124 = scmp.eq.s32.totalorder %s23, 1
      %p125 = por %p123, %p124
      %p126 = scmp.ne.s32.totalorder %s117, %s118
      %p127 = scmp.eq.s32.totalorder %s23, 0
      %p128 = por %p126, %p127
      %p129 = scmp.ne.s32.totalorder %s117, %s118
      %p130 = scmp.eq.s32.totalorder %s24, 1
      %p131 = por %p129, %p130
      %p133 = scmp.ne.s32.totalorder %s118, %s132
      %p134 = scmp.eq.s32.totalorder %s24, 0
      %p135 = por %p133, %p134
      %s136 = ssub.s32 %s18, %s25
      %p137 = scmp.eq.s32.totalorder %s136, 0
      %s139 = sadd.s32 %s138, 1
      %s140 = scalar_select %p137, %s138, %s139
      %p143 = pneg %p137
      %p144 = scmp.eq.s32.totalorder %s18, 1
      %p145 = por %p143, %p144
      %p146 = scmp.ne.s32.totalorder %s138, %s141
      %p147 = scmp.eq.s32.totalorder %s18, 0
      %p148 = por %p146, %p147
      %p149 = scmp.ne.s32.totalorder %s138, %s141
      %p150 = scmp.eq.s32.totalorder %s23, 1
      %p151 = por %p149, %p150
      %p152 = scmp.ne.s32.totalorder %s141, %s142
      %p153 = scmp.eq.s32.totalorder %s23, 0
      %p154 = por %p152, %p153
      %p155 = scmp.ne.s32.totalorder %s141, %s142
      %p156 = scmp.eq.s32.totalorder %s24, 1
      %p157 = por %p155, %p156
      %p159 = scmp.ne.s32.totalorder %s142, %s158
      %p160 = scmp.eq.s32.totalorder %s24, 0
      %p161 = por %p159, %p160
      %p162 = scmp.le.s32.totalorder 1, %s18
      %p163 = scmp.lt.s32.totalorder %s18, 3
      %p164 = pnand %p162, %p163
      %p165 = pneg %p164
      // Predicated region
      $region9: #{tpu_custom_call.1} parent=5 // pred_check
        _
      $region10: #{tpu_custom_call.1} parent=5 // pred_check_branch
        %167 = sbr.rel (%p164) target = $region12
      $region11: #{tpu_custom_call.1} parent=5 // pred_region
        %s168 = ssub.s32 %s18, 1
        // Predicated region
        $region13: #{tpu_custom_call.1} parent=11 // pred_check
          %p169 = pneg %p65
        $region14: #{tpu_custom_call.1} parent=11 // pred_check_branch
          %171 = sbr.rel (%p169) target = $region16
        $region15: #{tpu_custom_call.1} parent=11 // pred_region
          %173 = vsyncadd [#allocation8], 0
          %s174 = sshll.u32 %s1, 4
          %s175 = int_to_ptr.hbm [resolvable:$true] %s174
          %s176 = sshll.u32 [#allocation7], 4
          %s177 = int_to_ptr.vmem [resolvable:$true] %s176
          %182 = dma.hbm_to_vmem [thread:$0]  %s175, 1728, %s177, [#allocation8], 64, 64, 4
        $region16: #{tpu_custom_call.1} parent=11 // pred_fallthru
          _
        // Predicated region
        $region17: #{tpu_custom_call.1} parent=11 // pred_check
          %p183 = pneg %p86
        $region18: #{tpu_custom_call.1} parent=11 // pred_check_branch
          %185 = sbr.rel (%p183) target = $region20
        $region19: #{tpu_custom_call.1} parent=11 // pred_region
          _
        $region20: #{tpu_custom_call.1} parent=11 // pred_fallthru
          _
        // Predicated region
        $region21: #{tpu_custom_call.1} parent=11 // pred_check
          %p186 = pneg %p107
        $region22: #{tpu_custom_call.1} parent=11 // pred_check_branch
          %188 = sbr.rel (%p186) target = $region24
        $region23: #{tpu_custom_call.1} parent=11 // pred_region
          %190 = vsyncadd [#allocation8], 0
          %s191 = sshll.u32 %s3, 4
          %s192 = int_to_ptr.hbm [resolvable:$true] %s191
          %s193 = sshll.u32 [#allocation9], 4
          %s194 = int_to_ptr.vmem [resolvable:$true] %s193
          %199 = dma.hbm_to_vmem [thread:$0]  %s192, 3456, %s194, [#allocation8], 64, 64, 4
        $region24: #{tpu_custom_call.1} parent=11 // pred_fallthru
          _
        // Predicated region
        $region25: #{tpu_custom_call.1} parent=11 // pred_check
          %p200 = pneg %p128
        $region26: #{tpu_custom_call.1} parent=11 // pred_check_branch
          %202 = sbr.rel (%p200) target = $region28
        $region27: #{tpu_custom_call.1} parent=11 // pred_region
          _
        $region28: #{tpu_custom_call.1} parent=11 // pred_fallthru
          _
      $region12: #{tpu_custom_call.1} parent=5 // pred_fallthru
        _
      %p203 = scmp.lt.s32.totalorder %s18, 2
      // Predicated region
      $region29: #{tpu_custom_call.1} parent=5 // pred_check
        %p204 = pneg %p203
      $region30: #{tpu_custom_call.1} parent=5 // pred_check_branch
        %206 = sbr.rel (%p204) target = $region32
      $region31: #{tpu_custom_call.1} parent=5 // pred_region
        // Predicated region
        $region33: #{tpu_custom_call.1} parent=31 // pred_check
          %p207 = pneg %p38
        $region34: #{tpu_custom_call.1} parent=31 // pred_check_branch
          %209 = sbr.rel (%p207) target = $region36
        $region35: #{tpu_custom_call.1} parent=31 // pred_region
          %s210 = sand.u32 %s28, 1
          %s211 = scalar_lea.sflag [#allocation5], %s210
          %s212 = sand.u32 %s28, 1
          %s213 = smul.addr %s212, 16
          %s214 = scalar_lea.vmem [#allocation4], %s213
          %216 = vsyncadd %s211, 0
          %s217 = smul.addr %s18, 2
          %s218 = smul.addr %s217, 8
          %s219 = scalar_lea.hbm %s0, %s218
          %s220 = sshll.u32 %s219, 4
          %s221 = int_to_ptr.hbm [resolvable:$true] %s220
          %s222 = sshll.u32 %s214, 4
          %s223 = int_to_ptr.vmem [resolvable:$true] %s222
          %228 = dma.hbm_to_vmem [thread:$0]  %s221, 256, %s223, %s211, 128, 128, 8
        $region36: #{tpu_custom_call.1} parent=31 // pred_fallthru
          _
      $region32: #{tpu_custom_call.1} parent=5 // pred_fallthru
        _
      %p229 = scmp.le.s32.totalorder 1, %s18
      %p230 = scmp.lt.s32.totalorder %s18, 3
      %p231 = pnand %p229, %p230
      %p232 = pneg %p231
      // Predicated region
      $region37: #{tpu_custom_call.1} parent=5 // pred_check
        _
      $region38: #{tpu_custom_call.1} parent=5 // pred_check_branch
        %234 = sbr.rel (%p231) target = $region40
      $region39: #{tpu_custom_call.1} parent=5 // pred_region
        %s235 = ssub.s32 %s18, 1
        %s236 = sand.u32 %s31, 1
        %s237 = scalar_lea.sflag [#allocation5], %s236
        %s238 = sand.u32 %s31, 1
        %s239 = smul.addr %s238, 16
        %s240 = scalar_lea.vmem [#allocation4], %s239
        // Predicated region
        $region41: #{tpu_custom_call.1} parent=39 // pred_check
          %p241 = pneg %p44
        $region42: #{tpu_custom_call.1} parent=39 // pred_check_branch
          %243 = sbr.rel (%p241) target = $region44
        $region43: #{tpu_custom_call.1} parent=39 // pred_region
          %245 = dma.done %s237, 256
        $region44: #{tpu_custom_call.1} parent=39 // pred_fallthru
          _
        // Predicated region
        $region45: #{tpu_custom_call.1} parent=39 // pred_check
          %p246 = pneg %p65
        $region46: #{tpu_custom_call.1} parent=39 // pred_check_branch
          %248 = sbr.rel (%p246) target = $region48
        $region47: #{tpu_custom_call.1} parent=39 // pred_region
          %250 = dma.done [#allocation8], 1728
        $region48: #{tpu_custom_call.1} parent=39 // pred_fallthru
          _
        // Predicated region
        $region49: #{tpu_custom_call.1} parent=39 // pred_check
          %p251 = pneg %p107
        $region50: #{tpu_custom_call.1} parent=39 // pred_check_branch
          %253 = sbr.rel (%p251) target = $region52
        $region51: #{tpu_custom_call.1} parent=39 // pred_region
          %255 = dma.done [#allocation8], 3456
        $region52: #{tpu_custom_call.1} parent=39 // pred_fallthru
          _
        %s256 = sand.u32 %s31, 1
        %s257 = scalar_lea.sflag [#allocation5], %s256
        %s258 = sand.u32 %s31, 1
        %s259 = smul.addr %s258, 16
        %s260 = scalar_lea.vmem [#allocation4], %s259
        %p261 = pneg %p44
        %p262 = pneg %p41
        %p263 = pneg %p65
        %p264 = pneg %p62
        %p265 = pneg %p86
        %p266 = pneg %p83
        %p267 = pneg %p107
        %p268 = pneg %p104
        %p269 = pneg %p128
        %p270 = pneg %p125
        %p271 = pneg %p154
        %p272 = pneg %p151
        %s273 = sand.u32 %s141, 1
        %s274 = scalar_lea.sflag [#allocation6], %s273
        %s275 = sand.u32 %s141, 1
        %s276 = smul.addr %s275, 16
        %s277 = scalar_lea.vmem [#allocation10], %s276
        %vm279 = vcmask 588800
        %280 = vst.msk [vmem:[#allocation2] sm:$0xff] %vm279, 0.0
        %281 = vst.msk [vmem:[#allocation2 + $0x8] sm:$0xff] %vm279, 0.0
        %vm282 = vcmask 582656
        %283 = vst.msk [vmem:[#allocation2 + $0x10] sm:$0x3] %vm282, 0.0
        %284 = vst [vmem:[#allocation3] sm:$0xff] 0.0
        %vm285 = vcmask 130048
        %286 = vst.msk [vmem:[#allocation3 + $0x8] sm:$0xff] %vm285, 0.0
        %287 = vst [vmem:[#allocation3 + $0x10] sm:$0xff] 0.0
        %288 = vst.msk [vmem:[#allocation3 + $0x18] sm:$0xff] %vm285, 0.0
        %289 = vst [vmem:[#allocation3 + $0x20] sm:$0x3] 0.0
        %vm290 = vcmask 123904
        %291 = vst.msk [vmem:[#allocation3 + $0x28] sm:$0x3] %vm290, 0.0
        %v292 = vld [vmem:[%s240] sm:$0xff]
        %v293 = vld [vmem:[%s240 + $0x8] sm:$0xff]
        %296 = vrot.lane.b32.xlu0 %v292, 4
        %v297 = vpop.permute.xlu0 %296
        %298 = vrot.lane.b32.xlu0 %v293, 4
        %v299 = vpop.permute.xlu0 %298
        %vm302 = vcmask 556064
        %303 = vst.msk [vmem:[#allocation2 + $0x1] sm:$0xff] %vm302, %v297
        %304 = vst.msk [vmem:[#allocation2 + $0x9] sm:$0xff] %vm302, %v299
        %v305 = vld [vmem:[#allocation2] sm:$0xff]
        %v306 = vld [vmem:[#allocation2 + $0x8] sm:$0xff]
        %v307 = vpack.c.bf16 %v306, %v305
        %v308 = vld [vmem:[#allocation7] sm:$0xf]
        %v309 = vld [vmem:[#allocation7 + $0x4] sm:$0xf]
        %v310 = vld [vmem:[#allocation7 + $0x8] sm:$0xf]
        %v311 = vld [vmem:[#allocation7 + $0xc] sm:$0xf]
        %v312 = vld [vmem:[#allocation7 + $0x10] sm:$0xf]
        %v313 = vld [vmem:[#allocation7 + $0x14] sm:$0xf]
        %v314 = vld [vmem:[#allocation7 + $0x18] sm:$0xf]
        %v315 = vld [vmem:[#allocation7 + $0x1c] sm:$0xf]
        %v316 = vld [vmem:[#allocation7 + $0x20] sm:$0xf]
        %v317 = vld [vmem:[#allocation2 + $0x1] sm:$0xff]
        %v318 = vld [vmem:[#allocation2 + $0x9] sm:$0xff]
        %v319 = vpack.c.bf16 %v318, %v317
        %s320 = scalar_lea.vmem [#allocation7], 36
        %v321 = vld [vmem:[%s320] sm:$0xf]
        %v322 = vld [vmem:[%s320 + $0x4] sm:$0xf]
        %v323 = vld [vmem:[%s320 + $0x8] sm:$0xf]
        %v324 = vld [vmem:[%s320 + $0xc] sm:$0xf]
        %v325 = vld [vmem:[%s320 + $0x10] sm:$0xf]
        %v326 = vld [vmem:[%s320 + $0x14] sm:$0xf]
        %v327 = vld [vmem:[%s320 + $0x18] sm:$0xf]
        %v328 = vld [vmem:[%s320 + $0x1c] sm:$0xf]
        %v329 = vld [vmem:[%s320 + $0x20] sm:$0xf]
        %v339 = vunpack.c.l.b16 %v321
        %v340 = vunpack.c.l.b16 %v322
        %v341 = vunpack.c.l.b16 %v323
        %v342 = vunpack.c.l.b16 %v324
        %v343 = vunpack.c.l.b16 %v325
        %v344 = vunpack.c.l.b16 %v326
        %v345 = vunpack.c.l.b16 %v327
        %v346 = vunpack.c.l.b16 %v328
        %v347 = vunpack.c.l.b16 %v329
        %v348 = vpack.c.b16 %v340, %v339
        %v349 = vpack.c.b16 %v342, %v341
        %v350 = vpack.c.b16 %v344, %v343
        %v351 = vpack.c.b16 %v346, %v345
        %v352 = vpack.c.b16 %v347, %v347
        %v358 = vsel %vm279, %v319, 0
        %vm360 = vcmask 1043456
        %v362 = vsel %vm360, %v352, 0
        %364 = vmatpush.bf16.msra.mxu0 0
        %365 = vmatpush.bf16.msra.mxu0 0
        %366 = vmatpush.bf16.msra.mxu0 0
        %367 = vmatpush.bf16.msra.mxu0 %v362
        %368 = vmatpush.bf16.msra.mxu0 %v351
        %369 = vmatpush.bf16.msra.mxu0 %v350
        %370 = vmatpush.bf16.msra.mxu0 %v349
        %371 = vmatpush.bf16.msra.mxu0 %v348
        %372 = vmatmul.bf16.gmra.mxu0 %v358
        %v373 = vpop.f32.mrf.mxu0
        %v374 = vadd.f32 0.0, %v373
        %v375 = vpop.f32.mrf.mxu0
        %v376 = vadd.f32 0.0, %v375
        %377 = vdwg.mxu0
        %v387 = vunpack.c.l.b16 %v308
        %v388 = vunpack.c.l.b16 %v309
        %v389 = vunpack.c.l.b16 %v310
        %v390 = vunpack.c.l.b16 %v311
        %v391 = vunpack.c.l.b16 %v312
        %v392 = vunpack.c.l.b16 %v313
        %v393 = vunpack.c.l.b16 %v314
        %v394 = vunpack.c.l.b16 %v315
        %v395 = vunpack.c.l.b16 %v316
        %v396 = vpack.c.b16 %v388, %v387
        %v397 = vpack.c.b16 %v390, %v389
        %v398 = vpack.c.b16 %v392, %v391
        %v399 = vpack.c.b16 %v394, %v393
        %v400 = vpack.c.b16 %v395, %v395
        %v406 = vsel %vm279, %v307, 0
        %v409 = vsel %vm360, %v400, 0
        %411 = vmatpush.bf16.msra.mxu0 0
        %412 = vmatpush.bf16.msra.mxu0 0
        %413 = vmatpush.bf16.msra.mxu0 0
        %414 = vmatpush.bf16.msra.mxu0 %v409
        %415 = vmatpush.bf16.msra.mxu0 %v399
        %416 = vmatpush.bf16.msra.mxu0 %v398
        %417 = vmatpush.bf16.msra.mxu0 %v397
        %418 = vmatpush.bf16.msra.mxu0 %v396
        %419 = vmatmul.bf16.gmra.mxu0 %v406
        %v420 = vpop.f32.mrf.mxu0
        %v421 = vadd.f32 %v374, %v420
        %v422 = vpop.f32.mrf.mxu0
        %v423 = vadd.f32 %v376, %v422
        %424 = vdwg.mxu0
        %v425 = vld [vmem:[#allocation2 + $0x2] sm:$0xff]
        %v426 = vld [vmem:[#allocation2 + $0xa] sm:$0xff]
        %v427 = vpack.c.bf16 %v426, %v425
        %s428 = scalar_lea.vmem [#allocation7], 72
        %v429 = vld [vmem:[%s428] sm:$0xf]
        %v430 = vld [vmem:[%s428 + $0x4] sm:$0xf]
        %v431 = vld [vmem:[%s428 + $0x8] sm:$0xf]
        %v432 = vld [vmem:[%s428 + $0xc] sm:$0xf]
        %v433 = vld [vmem:[%s428 + $0x10] sm:$0xf]
        %v434 = vld [vmem:[%s428 + $0x14] sm:$0xf]
        %v435 = vld [vmem:[%s428 + $0x18] sm:$0xf]
        %v436 = vld [vmem:[%s428 + $0x1c] sm:$0xf]
        %v437 = vld [vmem:[%s428 + $0x20] sm:$0xf]
        %v447 = vunpack.c.l.b16 %v429
        %v448 = vunpack.c.l.b16 %v430
        %v449 = vunpack.c.l.b16 %v431
        %v450 = vunpack.c.l.b16 %v432
        %v451 = vunpack.c.l.b16 %v433
        %v452 = vunpack.c.l.b16 %v434
        %v453 = vunpack.c.l.b16 %v435
        %v454 = vunpack.c.l.b16 %v436
        %v455 = vunpack.c.l.b16 %v437
        %v456 = vpack.c.b16 %v448, %v447
        %v457 = vpack.c.b16 %v450, %v449
        %v458 = vpack.c.b16 %v452, %v451
        %v459 = vpack.c.b16 %v454, %v453
        %v460 = vpack.c.b16 %v455, %v455
        %v466 = vsel %vm279, %v427, 0
        %v469 = vsel %vm360, %v460, 0
        %471 = vmatpush.bf16.msra.mxu0 0
        %472 = vmatpush.bf16.msra.mxu0 0
        %473 = vmatpush.bf16.msra.mxu0 0
        %474 = vmatpush.bf16.msra.mxu0 %v469
        %475 = vmatpush.bf16.msra.mxu0 %v459
        %476 = vmatpush.bf16.msra.mxu0 %v458
        %477 = vmatpush.bf16.msra.mxu0 %v457
        %478 = vmatpush.bf16.msra.mxu0 %v456
        %479 = vmatmul.bf16.gmra.mxu0 %v466
        %v480 = vpop.f32.mrf.mxu0
        %v481 = vadd.f32 0.0, %v480
        %v482 = vpop.f32.mrf.mxu0
        %v483 = vadd.f32 0.0, %v482
        %484 = vdwg.mxu0
        %v485 = vadd.f32 %v421, %v481
        %v486 = vadd.f32 %v423, %v483
        %v487 = vld [vmem:[%s2] sm:$0x1]
        %v489 = vperm.slane %v487, 0
        %v491 = vadd.f32 %v485, %v489
        %v492 = vadd.f32 %v486, %v489
        %v493 = vmax.f32 %v491, 0.0
        %v494 = vmax.f32 %v492, 0.0
        %vm497 = vcmask 1040384
        %v498 = vrot.slane %v493, 7
        %v499 = vrot.slane %v494, 7
        %v500 = vsel %vm497, %v498, %v499
        %501 = vrot.lane.b32.xlu0 %v498, 8
        %v502 = vpop.permute.xlu0 %501
        %503 = vrot.lane.b32.xlu0 %v500, 8
        %v504 = vpop.permute.xlu0 %503
        %505 = vrot.lane.b32.xlu0 %v499, 8
        %v506 = vpop.permute.xlu0 %505
        %vm510 = vcmask 1047617
        %511 = vst.msk [vmem:[#allocation3] sm:$0xfe] %vm510, %v502
        %vm512 = vcmask 64513
        %513 = vst.msk [vmem:[#allocation3 + $0x8] sm:$0xfe] %vm512, %v502
        %vm514 = vcmask 1047616
        %515 = vst.msk [vmem:[#allocation3 + $0x10] sm:$0xff] %vm514, %v504
        %vm516 = vcmask 64512
        %517 = vst.msk [vmem:[#allocation3 + $0x18] sm:$0xff] %vm516, %v504
        %vm518 = vcmask 1040448
        %519 = vst.msk [vmem:[#allocation3 + $0x20] sm:$0x1] %vm518, %v506
        %vm520 = vcmask 57344
        %521 = vst.msk [vmem:[#allocation3 + $0x28] sm:$0x1] %vm520, %v506
        %v522 = vld [vmem:[#allocation3] sm:$0xff]
        %v523 = vld [vmem:[#allocation3 + $0x8] sm:$0xff]
        %v524 = vld [vmem:[#allocation3 + $0x10] sm:$0xff]
        %v525 = vld [vmem:[#allocation3 + $0x18] sm:$0xff]
        %v526 = vpack.c.bf16 %v524, %v522
        %v527 = vpack.c.bf16 %v525, %v523
        %v528 = vld [vmem:[#allocation9] sm:$0xf]
        %v529 = vld [vmem:[#allocation9 + $0x4] sm:$0xf]
        %v530 = vld [vmem:[#allocation9 + $0x8] sm:$0xf]
        %v531 = vld [vmem:[#allocation9 + $0xc] sm:$0xf]
        %v532 = vld [vmem:[#allocation9 + $0x10] sm:$0xf]
        %v533 = vld [vmem:[#allocation9 + $0x14] sm:$0xf]
        %v534 = vld [vmem:[#allocation9 + $0x18] sm:$0xf]
        %v535 = vld [vmem:[#allocation9 + $0x1c] sm:$0xf]
        %v536 = vld [vmem:[#allocation9 + $0x20] sm:$0xf]
        %v537 = vld [vmem:[#allocation9 + $0x24] sm:$0xf]
        %v538 = vld [vmem:[#allocation9 + $0x28] sm:$0xf]
        %v539 = vld [vmem:[#allocation9 + $0x2c] sm:$0xf]
        %v540 = vld [vmem:[#allocation9 + $0x30] sm:$0xf]
        %v541 = vld [vmem:[#allocation9 + $0x34] sm:$0xf]
        %v542 = vld [vmem:[#allocation9 + $0x38] sm:$0xf]
        %v543 = vld [vmem:[#allocation9 + $0x3c] sm:$0xf]
        %v544 = vld [vmem:[#allocation9 + $0x40] sm:$0xf]
        %v545 = vld [vmem:[#allocation9 + $0x44] sm:$0xf]
        %v546 = vld [vmem:[#allocation3] sm:$0xfe]
        %v547 = vld [vmem:[#allocation3 + $0x8] sm:$0xfe]
        %v548 = vld [vmem:[#allocation3 + $0x20] sm:$0x1]
        %v549 = vld [vmem:[#allocation3 + $0x28] sm:$0x1]
        %v550 = vpack.c.bf16 %v524, %v546
        %v551 = vpack.c.bf16 %v525, %v547
        %v552 = vpack.c.bf16 %v548, %v548
        %v553 = vpack.c.bf16 %v549, %v549
        %s554 = scalar_lea.vmem [#allocation9], 72
        %v555 = vld [vmem:[%s554] sm:$0xf]
        %v556 = vld [vmem:[%s554 + $0x4] sm:$0xf]
        %v557 = vld [vmem:[%s554 + $0x8] sm:$0xf]
        %v558 = vld [vmem:[%s554 + $0xc] sm:$0xf]
        %v559 = vld [vmem:[%s554 + $0x10] sm:$0xf]
        %v560 = vld [vmem:[%s554 + $0x14] sm:$0xf]
        %v561 = vld [vmem:[%s554 + $0x18] sm:$0xf]
        %v562 = vld [vmem:[%s554 + $0x1c] sm:$0xf]
        %v563 = vld [vmem:[%s554 + $0x20] sm:$0xf]
        %v564 = vld [vmem:[%s554 + $0x24] sm:$0xf]
        %v565 = vld [vmem:[%s554 + $0x28] sm:$0xf]
        %v566 = vld [vmem:[%s554 + $0x2c] sm:$0xf]
        %v567 = vld [vmem:[%s554 + $0x30] sm:$0xf]
        %v568 = vld [vmem:[%s554 + $0x34] sm:$0xf]
        %v569 = vld [vmem:[%s554 + $0x38] sm:$0xf]
        %v570 = vld [vmem:[%s554 + $0x3c] sm:$0xf]
        %v571 = vld [vmem:[%s554 + $0x40] sm:$0xf]
        %v572 = vld [vmem:[%s554 + $0x44] sm:$0xf]
        %vm573 = vsmask.f32 7424
        %v575 = vshrl.u32 %v550, 16
        %v577 = vshll.u32 %v550, 16
        %v579 = vrot.slane %v577, 1
        %v580 = vor.u32 %v575, %v579
        %v582 = vshll.u32 %v552, 16
        %v584 = vrot.slane %v582, 1
        %v585 = vsel %vm573, %v580, %v584
        %v587 = vshrl.u32 %v551, 16
        %v589 = vshll.u32 %v551, 16
        %v591 = vrot.slane %v589, 1
        %v592 = vor.u32 %v587, %v591
        %v594 = vshll.u32 %v553, 16
        %v596 = vrot.slane %v594, 1
        %v597 = vsel %vm573, %v592, %v596
        %v617 = vunpack.c.l.b16 %v555
        %v618 = vunpack.c.l.b16 %v556
        %v619 = vunpack.c.l.b16 %v557
        %v620 = vunpack.c.l.b16 %v558
        %v621 = vunpack.c.l.b16 %v559
        %v622 = vunpack.c.l.b16 %v560
        %v623 = vunpack.c.l.b16 %v561
        %v624 = vunpack.c.l.b16 %v562
        %v625 = vunpack.c.l.b16 %v563
        %v626 = vunpack.c.l.b16 %v564
        %v627 = vunpack.c.l.b16 %v565
        %v628 = vunpack.c.l.b16 %v566
        %v629 = vunpack.c.l.b16 %v567
        %v630 = vunpack.c.l.b16 %v568
        %v631 = vunpack.c.l.b16 %v569
        %v632 = vunpack.c.l.b16 %v570
        %v633 = vunpack.c.l.b16 %v571
        %v634 = vunpack.c.l.b16 %v572
        %v635 = vpack.c.b16 %v618, %v617
        %v636 = vpack.c.b16 %v620, %v619
        %v637 = vpack.c.b16 %v622, %v621
        %v638 = vpack.c.b16 %v624, %v623
        %v639 = vpack.c.b16 %v626, %v625
        %v640 = vpack.c.b16 %v628, %v627
        %v641 = vpack.c.b16 %v630, %v629
        %v642 = vpack.c.b16 %v632, %v631
        %v643 = vpack.c.b16 %v634, %v633
        %v654 = vsel %vm285, %v597, 0
        %656 = vmatpush.bf16.msra.mxu0 %v642
        %657 = vmatpush.bf16.msra.mxu0 %v641
        %658 = vmatpush.bf16.msra.mxu0 %v640
        %659 = vmatpush.bf16.msra.mxu0 %v639
        %660 = vmatpush.bf16.msra.mxu0 %v638
        %661 = vmatpush.bf16.msra.mxu0 %v637
        %662 = vmatpush.bf16.msra.mxu0 %v636
        %663 = vmatpush.bf16.msra.mxu0 %v635
        %664 = vmatmul.bf16.gmra.mxu0 %v585
        %v665 = vpop.f32.mrf.mxu0
        %v666 = vadd.f32 0.0, %v665
        %v667 = vpop.f32.mrf.mxu0
        %v668 = vadd.f32 0.0, %v667
        %669 = vdwg.mxu0
        %670 = vmatpush.bf16.msra.mxu0 0
        %671 = vmatpush.bf16.msra.mxu0 0
        %672 = vmatpush.bf16.msra.mxu0 0
        %673 = vmatpush.bf16.msra.mxu0 0
        %674 = vmatpush.bf16.msra.mxu0 0
        %675 = vmatpush.bf16.msra.mxu0 0
        %676 = vmatpush.bf16.msra.mxu0 0
        %677 = vmatpush.bf16.msra.mxu0 %v643
        %678 = vmatmul.bf16.gmra.mxu0 %v654
        %v679 = vpop.f32.mrf.mxu0
        %v680 = vadd.f32 %v666, %v679
        %v681 = vpop.f32.mrf.mxu0
        %v682 = vadd.f32 %v668, %v681
        %683 = vdwg.mxu0
        %v702 = vunpack.c.l.b16 %v528
        %v703 = vunpack.c.l.b16 %v529
        %v704 = vunpack.c.l.b16 %v530
        %v705 = vunpack.c.l.b16 %v531
        %v706 = vunpack.c.l.b16 %v532
        %v707 = vunpack.c.l.b16 %v533
        %v708 = vunpack.c.l.b16 %v534
        %v709 = vunpack.c.l.b16 %v535
        %v710 = vunpack.c.l.b16 %v536
        %v711 = vunpack.c.l.b16 %v537
        %v712 = vunpack.c.l.b16 %v538
        %v713 = vunpack.c.l.b16 %v539
        %v714 = vunpack.c.l.b16 %v540
        %v715 = vunpack.c.l.b16 %v541
        %v716 = vunpack.c.l.b16 %v542
        %v717 = vunpack.c.l.b16 %v543
        %v718 = vunpack.c.l.b16 %v544
        %v719 = vunpack.c.l.b16 %v545
        %v720 = vpack.c.b16 %v703, %v702
        %v721 = vpack.c.b16 %v705, %v704
        %v722 = vpack.c.b16 %v707, %v706
        %v723 = vpack.c.b16 %v709, %v708
        %v724 = vpack.c.b16 %v711, %v710
        %v725 = vpack.c.b16 %v713, %v712
        %v726 = vpack.c.b16 %v715, %v714
        %v727 = vpack.c.b16 %v717, %v716
        %v728 = vpack.c.b16 %v719, %v718
        %v739 = vsel %vm285, %v527, 0
        %741 = vmatpush.bf16.msra.mxu0 %v727
        %742 = vmatpush.bf16.msra.mxu0 %v726
        %743 = vmatpush.bf16.msra.mxu0 %v725
        %744 = vmatpush.bf16.msra.mxu0 %v724
        %745 = vmatpush.bf16.msra.mxu0 %v723
        %746 = vmatpush.bf16.msra.mxu0 %v722
        %747 = vmatpush.bf16.msra.mxu0 %v721
        %748 = vmatpush.bf16.msra.mxu0 %v720
        %749 = vmatmul.bf16.gmra.mxu0 %v526
        %v750 = vpop.f32.mrf.mxu0
        %v751 = vadd.f32 %v680, %v750
        %v752 = vpop.f32.mrf.mxu0
        %v753 = vadd.f32 %v682, %v752
        %754 = vdwg.mxu0
        %755 = vmatpush.bf16.msra.mxu0 0
        %756 = vmatpush.bf16.msra.mxu0 0
        %757 = vmatpush.bf16.msra.mxu0 0
        %758 = vmatpush.bf16.msra.mxu0 0
        %759 = vmatpush.bf16.msra.mxu0 0
        %760 = vmatpush.bf16.msra.mxu0 0
        %761 = vmatpush.bf16.msra.mxu0 0
        %762 = vmatpush.bf16.msra.mxu0 %v728
        %763 = vmatmul.bf16.gmra.mxu0 %v739
        %v764 = vpop.f32.mrf.mxu0
        %v765 = vadd.f32 %v751, %v764
        %v766 = vpop.f32.mrf.mxu0
        %v767 = vadd.f32 %v753, %v766
        %768 = vdwg.mxu0
        %v769 = vld [vmem:[#allocation3] sm:$0xfc]
        %v770 = vld [vmem:[#allocation3 + $0x8] sm:$0xfc]
        %v771 = vld [vmem:[#allocation3 + $0x20] sm:$0x3]
        %v772 = vld [vmem:[#allocation3 + $0x28] sm:$0x3]
        %v773 = vpack.c.bf16 %v524, %v769
        %v774 = vpack.c.bf16 %v525, %v770
        %v775 = vpack.c.bf16 %v771, %v771
        %v776 = vpack.c.bf16 %v772, %v772
        %s777 = scalar_lea.vmem [#allocation9], 144
        %v778 = vld [vmem:[%s777] sm:$0xf]
        %v779 = vld [vmem:[%s777 + $0x4] sm:$0xf]
        %v780 = vld [vmem:[%s777 + $0x8] sm:$0xf]
        %v781 = vld [vmem:[%s777 + $0xc] sm:$0xf]
        %v782 = vld [vmem:[%s777 + $0x10] sm:$0xf]
        %v783 = vld [vmem:[%s777 + $0x14] sm:$0xf]
        %v784 = vld [vmem:[%s777 + $0x18] sm:$0xf]
        %v785 = vld [vmem:[%s777 + $0x1c] sm:$0xf]
        %v786 = vld [vmem:[%s777 + $0x20] sm:$0xf]
        %v787 = vld [vmem:[%s777 + $0x24] sm:$0xf]
        %v788 = vld [vmem:[%s777 + $0x28] sm:$0xf]
        %v789 = vld [vmem:[%s777 + $0x2c] sm:$0xf]
        %v790 = vld [vmem:[%s777 + $0x30] sm:$0xf]
        %v791 = vld [vmem:[%s777 + $0x34] sm:$0xf]
        %v792 = vld [vmem:[%s777 + $0x38] sm:$0xf]
        %v793 = vld [vmem:[%s777 + $0x3c] sm:$0xf]
        %v794 = vld [vmem:[%s777 + $0x40] sm:$0xf]
        %v795 = vld [vmem:[%s777 + $0x44] sm:$0xf]
        %vm800 = vcmask 1046528
        %v801 = vrot.slane %v773, 1
        %v802 = vrot.slane %v775, 1
        %v803 = vsel %vm800, %v801, %v802
        %v804 = vrot.slane %v774, 1
        %v805 = vrot.slane %v776, 1
        %v806 = vsel %vm800, %v804, %v805
        %v826 = vunpack.c.l.b16 %v778
        %v827 = vunpack.c.l.b16 %v779
        %v828 = vunpack.c.l.b16 %v780
        %v829 = vunpack.c.l.b16 %v781
        %v830 = vunpack.c.l.b16 %v782
        %v831 = vunpack.c.l.b16 %v783
        %v832 = vunpack.c.l.b16 %v784
        %v833 = vunpack.c.l.b16 %v785
        %v834 = vunpack.c.l.b16 %v786
        %v835 = vunpack.c.l.b16 %v787
        %v836 = vunpack.c.l.b16 %v788
        %v837 = vunpack.c.l.b16 %v789
        %v838 = vunpack.c.l.b16 %v790
        %v839 = vunpack.c.l.b16 %v791
        %v840 = vunpack.c.l.b16 %v792
        %v841 = vunpack.c.l.b16 %v793
        %v842 = vunpack.c.l.b16 %v794
        %v843 = vunpack.c.l.b16 %v795
        %v844 = vpack.c.b16 %v827, %v826
        %v845 = vpack.c.b16 %v829, %v828
        %v846 = vpack.c.b16 %v831, %v830
        %v847 = vpack.c.b16 %v833, %v832
        %v848 = vpack.c.b16 %v835, %v834
        %v849 = vpack.c.b16 %v837, %v836
        %v850 = vpack.c.b16 %v839, %v838
        %v851 = vpack.c.b16 %v841, %v840
        %v852 = vpack.c.b16 %v843, %v842
        %v863 = vsel %vm285, %v806, 0
        %865 = vmatpush.bf16.msra.mxu0 %v851
        %866 = vmatpush.bf16.msra.mxu0 %v850
        %867 = vmatpush.bf16.msra.mxu0 %v849
        %868 = vmatpush.bf16.msra.mxu0 %v848
        %869 = vmatpush.bf16.msra.mxu0 %v847
        %870 = vmatpush.bf16.msra.mxu0 %v846
        %871 = vmatpush.bf16.msra.mxu0 %v845
        %872 = vmatpush.bf16.msra.mxu0 %v844
        %873 = vmatmul.bf16.gmra.mxu0 %v803
        %v874 = vpop.f32.mrf.mxu0
        %v875 = vadd.f32 0.0, %v874
        %v876 = vpop.f32.mrf.mxu0
        %v877 = vadd.f32 0.0, %v876
        %878 = vdwg.mxu0
        %879 = vmatpush.bf16.msra.mxu0 0
        %880 = vmatpush.bf16.msra.mxu0 0
        %881 = vmatpush.bf16.msra.mxu0 0
        %882 = vmatpush.bf16.msra.mxu0 0
        %883 = vmatpush.bf16.msra.mxu0 0
        %884 = vmatpush.bf16.msra.mxu0 0
        %885 = vmatpush.bf16.msra.mxu0 0
        %886 = vmatpush.bf16.msra.mxu0 %v852
        %887 = vmatmul.bf16.gmra.mxu0 %v863
        %v888 = vpop.f32.mrf.mxu0
        %v889 = vadd.f32 %v875, %v888
        %v890 = vpop.f32.mrf.mxu0
        %v891 = vadd.f32 %v877, %v890
        %892 = vdwg.mxu0
        %v893 = vadd.f32 %v765, %v889
        %v894 = vadd.f32 %v767, %v891
        %v895 = vld [vmem:[%s4] sm:$0x1]
        %v897 = vperm.slane %v895, 0
        %v899 = vadd.f32 %v893, %v897
        %v900 = vadd.f32 %v894, %v897
        %v901 = vmax.f32 %v899, 0.0
        %v902 = vmax.f32 %v900, 0.0
        %903 = vst [vmem:[%s277] sm:$0xff] %v901
        %904 = vst [vmem:[%s277 + $0x8] sm:$0xff] %v902
        %s905 = sand.u32 %s141, 1
        %s906 = scalar_lea.sflag [#allocation6], %s905
        %s907 = sand.u32 %s141, 1
        %s908 = smul.addr %s907, 16
        %s909 = scalar_lea.vmem [#allocation10], %s908
        // Predicated region
        $region53: #{tpu_custom_call.1} parent=39 // pred_check
          %p910 = pneg %p151
        $region54: #{tpu_custom_call.1} parent=39 // pred_check_branch
          %912 = sbr.rel (%p910) target = $region56
        $region55: #{tpu_custom_call.1} parent=39 // pred_region
          %914 = vsyncadd %s906, 0
          %s915 = smul.addr %s23, 2
          %s916 = smul.addr %s915, 8
          %s917 = scalar_lea.hbm %s5, %s916
          %s918 = sshll.u32 %s909, 4
          %s919 = int_to_ptr.vmem [resolvable:$true] %s918
          %s920 = sshll.u32 %s917, 4
          %s921 = int_to_ptr.hbm [resolvable:$true] %s920
          %926 = dma.vmem_to_hbm [thread:$0]  %s919, 256, %s921, %s906, 128, 128, 8
        $region56: #{tpu_custom_call.1} parent=39 // pred_fallthru
          _
      $region40: #{tpu_custom_call.1} parent=5 // pred_fallthru
        _
      %p927 = scmp.le.s32.totalorder 2, %s18
      // Predicated region
      $region57: #{tpu_custom_call.1} parent=5 // pred_check
        %p928 = pneg %p927
      $region58: #{tpu_custom_call.1} parent=5 // pred_check_branch
        %930 = sbr.rel (%p928) target = $region60
      $region59: #{tpu_custom_call.1} parent=5 // pred_region
        %s931 = ssub.s32 %s18, 2
        // Predicated region
        $region61: #{tpu_custom_call.1} parent=59 // pred_check
          %p932 = pneg %p157
        $region62: #{tpu_custom_call.1} parent=59 // pred_check_branch
          %934 = sbr.rel (%p932) target = $region64
        $region63: #{tpu_custom_call.1} parent=59 // pred_region
          %s935 = sand.u32 %s142, 1
          %s936 = scalar_lea.sflag [#allocation6], %s935
          %s937 = sand.u32 %s142, 1
          %s938 = smul.addr %s937, 16
          %s939 = scalar_lea.vmem [#allocation10], %s938
          %941 = dma.done %s936, 256
        $region64: #{tpu_custom_call.1} parent=59 // pred_fallthru
          _
      $region60: #{tpu_custom_call.1} parent=5 // pred_fallthru
        _
    $region6: #{tpu_custom_call.1} parent=1 // loop_footer
      %s22 = sadd.s32 1, %s18
    $region7: #{tpu_custom_call.1} parent=1 // loop_footer_branch
      %17 = sbr.rel target = $region3
    $region8: #{tpu_custom_call.1} parent=1 // loop_exit
      _
    %942 = vsyncpa [#allocation5], 1
    %s943 = scalar_lea.sflag [#allocation5], 1
    %944 = vsyncpa %s943, 1
    %945 = vsyncpa [#allocation8], 1
    %946 = vsyncpa [#allocation6], 1
    %s947 = scalar_lea.sflag [#allocation6], 1
    %948 = vsyncpa %s947, 1

</llo_original>
